<compile_context>
chip_gen: v7x
topology: tpu7x:2x2x1
jax: 0.10.0
libtpu: 0.0.40
codegen_flags: <defaults>
</compile_context>

<pallas_src>
import math

import jax
import jax.numpy as jnp
from jax.experimental import pallas as pl
from jax.experimental.pallas import tpu as pltpu


def _gelu(x):
    # tanh-approximate GELU (lowers cleanly to the EUP on TPU)
    c = jnp.sqrt(2.0 / jnp.pi).astype(x.dtype)
    return 0.5 * x * (1.0 + jnp.tanh(c * (x + 0.044715 * x * x * x)))


def patch_mixer_kernel(xt_ref, seg_ref, gamma_ref, beta_ref, cond_ref,
                       w1t_ref, b1_ref, w2t_ref, b2_ref, o_ref):
    # xt_ref: (P, NC) slab where lane index = b*D + d (batch folded onto lanes).
    x = xt_ref[...].astype(jnp.float32)                      # (P, NC)
    seg = seg_ref[...]                                       # (NC, NC) block-diag 1/D

    # ---- LayerNorm over patch_dim: segmented mean/var via MXU matmul --------
    # seg is block-diagonal with 1/D blocks, so x @ seg is the per-(b,p) mean
    # over d, already broadcast back across each D-wide lane segment.
    mu = jnp.dot(x, seg, preferred_element_type=jnp.float32)
    xc = x - mu
    var = jnp.dot(xc * xc, seg, preferred_element_type=jnp.float32)
    h = xc * jax.lax.rsqrt(var + 1e-5)

    # ---- affine + (precomputed) time-embedding shift ------------------------
    h = h * gamma_ref[...] + beta_ref[...] + cond_ref[...]   # all (1, NC) broadcasts

    # ---- token-mixing MLP over n_patches (weights pre-transposed) -----------
    u = _gelu(jnp.dot(w1t_ref[...], h, preferred_element_type=jnp.float32)
              + b1_ref[...])                                 # (H, NC)
    v = jnp.dot(w2t_ref[...], u, preferred_element_type=jnp.float32) + b2_ref[...]  # (P, NC)

    # ---- residual, lane-dense store -----------------------------------------
    o_ref[...] = (x + v).astype(o_ref.dtype)


def _num_lane_chunks(n_lanes, d):
    # Chunk the folded lane axis into pieces that are multiples of both D
    # (so LayerNorm segments never straddle a chunk) and 128 (lane-dense).
    step = (d * 128) // math.gcd(d, 128)
    if n_lanes % step == 0:
        return max(n_lanes // step, 1)
    return 1


def patch_mixer_block(x, time_embed, params):
    B, P, D = x.shape
    H = params["w1"].shape[-1]
    N = B * D
    f32 = jnp.float32

    # --- wrapper-side (XLA) prep: hoisted cond projection + layout folding ---
    cond = time_embed.astype(f32) @ params["tw"].astype(f32) + params["tb"].astype(f32)  # (B, D)
    xt = jnp.transpose(x, (1, 0, 2)).reshape(P, N)               # (P, B*D), lane-dense
    cond_t = cond.reshape(1, N)                                  # lane b*D+d -> cond[b, d]
    gamma_t = jnp.tile(params["gamma"].reshape(1, D).astype(f32), (1, B))
    beta_t = jnp.tile(params["beta"].reshape(1, D).astype(f32), (1, B))
    w1t = params["w1"].astype(f32).T                             # (H, P)
    b1c = params["b1"].astype(f32).reshape(H, 1)
    w2t = params["w2"].astype(f32).T                             # (P, H)
    b2c = params["b2"].astype(f32).reshape(P, 1)

    n_chunks = _num_lane_chunks(N, D)
    NC = N // n_chunks
    # Block-diagonal segment-mean matrix: each (D, D) diagonal block is 1/D.
    seg = jnp.kron(jnp.eye(NC // D, dtype=f32), jnp.ones((D, D), f32)) / D

    const2d = lambda shape: pl.BlockSpec(shape, lambda j: (0, 0))

    out_t = pl.pallas_call(
        patch_mixer_kernel,
        out_shape=jax.ShapeDtypeStruct((P, N), x.dtype),
        grid_spec=pltpu.PrefetchScalarGridSpec(
            num_scalar_prefetch=0,
            grid=(n_chunks,),
            in_specs=[
                pl.BlockSpec((P, NC), lambda j: (0, j)),   # x, batch-folded slab
                const2d((NC, NC)),                         # segment-mean matrix
                pl.BlockSpec((1, NC), lambda j: (0, j)),   # LN gamma (tiled over batch)
                pl.BlockSpec((1, NC), lambda j: (0, j)),   # LN beta
                pl.BlockSpec((1, NC), lambda j: (0, j)),   # precomputed cond shift
                const2d((H, P)),                           # W1^T
                const2d((H, 1)),                           # b1
                const2d((P, H)),                           # W2^T
                const2d((P, 1)),                           # b2
            ],
            out_specs=pl.BlockSpec((P, NC), lambda j: (0, j)),
        ),
        compiler_params=pltpu.CompilerParams(
            dimension_semantics=("parallel",)),
    )(xt, seg, gamma_t, beta_t, cond_t, w1t, b1c, w2t, b2c)

    # un-fold back to [batch, n_patches, patch_dim]
    return out_t.reshape(P, B, D).transpose(1, 0, 2)


def _reference(x, t, p):
    """Pure-JAX reference for the same math."""
    mu = jnp.mean(x, axis=-1, keepdims=True)
    var = jnp.mean((x - mu) ** 2, axis=-1, keepdims=True)
    h = (x - mu) * jax.lax.rsqrt(var + 1e-5) * p["gamma"] + p["beta"]
    h = h + (t @ p["tw"] + p["tb"])[:, None, :]
    ht = jnp.swapaxes(h, 1, 2)                      # (B, D, P)
    u = _gelu(ht @ p["w1"] + p["b1"])               # (B, D, H)
    v = u @ p["w2"] + p["b2"]                       # (B, D, P)
    return x + jnp.swapaxes(v, 1, 2)


if __name__ == "__main__":
    # Small shapes implied by the module interface.
    B, P, D, C = 8, 8, 32, 16          # batch, n_patches, patch_dim, cond_dim
    EXP = 2
    H = P * EXP                        # token-mixing hidden width

    key = jax.random.PRNGKey(0)
    ks = jax.random.split(key, 8)

    x = jax.random.normal(ks[0], (B, P, D), dtype=jnp.float32)
    time_embed = jax.random.normal(ks[1], (B, C), dtype=jnp.float32)

    params = {
        "gamma": jnp.ones((1, D), jnp.float32),
        "beta":  jnp.zeros((1, D), jnp.float32),
        "tw": 0.1 * jax.random.normal(ks[2], (C, D), jnp.float32),
        "tb": 0.1 * jax.random.normal(ks[3], (1, D), jnp.float32),
        "w1": 0.1 * jax.random.normal(ks[4], (P, H), jnp.float32),
        "b1": 0.1 * jax.random.normal(ks[5], (1, H), jnp.float32),
        "w2": 0.1 * jax.random.normal(ks[6], (H, P), jnp.float32),
        "b2": 0.1 * jax.random.normal(ks[7], (1, P), jnp.float32),
    }

    out = patch_mixer_block(x, time_embed, params)
    out = jax.block_until_ready(out)

    ref = _reference(x, time_embed, params)
    assert out.shape == (B, P, D)
    assert jnp.allclose(out, ref, atol=1e-3, rtol=1e-3), "mismatch vs JAX reference"

    print("KERNEL_OK")
</pallas_src>

<mosaic_0001>
module attributes {stable_mosaic.version = 11 : i64} {
  func.func @patch_mixer_kernel(%arg0: i32, %arg1: memref<8x128xf32, #tpu.memory_space<vmem>>, %arg2: memref<128x128xf32, #tpu.memory_space<vmem>>, %arg3: memref<1x128xf32, #tpu.memory_space<vmem>>, %arg4: memref<1x128xf32, #tpu.memory_space<vmem>>, %arg5: memref<1x128xf32, #tpu.memory_space<vmem>>, %arg6: memref<16x8xf32, #tpu.memory_space<vmem>>, %arg7: memref<16x1xf32, #tpu.memory_space<vmem>>, %arg8: memref<8x16xf32, #tpu.memory_space<vmem>>, %arg9: memref<8x1xf32, #tpu.memory_space<vmem>>, %arg10: memref<8x128xf32, #tpu.memory_space<vmem>>) attributes {dimension_semantics = [#tpu.dimension_semantics<parallel>], iteration_bounds = array<i64: 2>, scalar_prefetch = 0 : i64, scratch_operands = 0 : i64, tpu.core_type = #tpu.core_type<tc>, window_params = [{transform_indices = @transform_0, window_bounds = array<i64: 8, 128>}, {pipeline_mode = #tpu.pipeline_mode<synchronous>, transform_indices = @transform_1, window_bounds = array<i64: 128, 128>}, {transform_indices = @transform_2, window_bounds = array<i64: 1, 128>}, {transform_indices = @transform_3, window_bounds = array<i64: 1, 128>}, {transform_indices = @transform_4, window_bounds = array<i64: 1, 128>}, {pipeline_mode = #tpu.pipeline_mode<synchronous>, transform_indices = @transform_5, window_bounds = array<i64: 16, 8>}, {pipeline_mode = #tpu.pipeline_mode<synchronous>, transform_indices = @transform_6, window_bounds = array<i64: 16, 1>}, {pipeline_mode = #tpu.pipeline_mode<synchronous>, transform_indices = @transform_7, window_bounds = array<i64: 8, 16>}, {pipeline_mode = #tpu.pipeline_mode<synchronous>, transform_indices = @transform_8, window_bounds = array<i64: 8, 1>}, {transform_indices = @transform_9, window_bounds = array<i64: 8, 128>}]} {
    %c0 = arith.constant 0 : index
    %c0_0 = arith.constant 0 : index
    %0 = vector.load %arg1[%c0, %c0_0] : memref<8x128xf32, #tpu.memory_space<vmem>>, vector<8x128xf32>
    %c0_1 = arith.constant 0 : index
    %c0_2 = arith.constant 0 : index
    %1 = vector.load %arg2[%c0_1, %c0_2] : memref<128x128xf32, #tpu.memory_space<vmem>>, vector<128x128xf32>
    %cst = arith.constant dense<0.000000e+00> : vector<8x128xf32>
    %2 = tpu.matmul %0, %1, %cst {dimension_numbers = #tpu.dot_dimension_numbers<[1], [0], [0], [1], [0, 0, 1, 1], [], []>} : vector<8x128xf32>, vector<128x128xf32>, vector<8x128xf32> -> vector<8x128xf32>
    %3 = arith.subf %0, %2 : vector<8x128xf32>
    %4 = arith.mulf %3, %3 : vector<8x128xf32>
    %cst_3 = arith.constant dense<0.000000e+00> : vector<8x128xf32>
    %5 = tpu.matmul %4, %1, %cst_3 {dimension_numbers = #tpu.dot_dimension_numbers<[1], [0], [0], [1], [0, 0, 1, 1], [], []>} : vector<8x128xf32>, vector<128x128xf32>, vector<8x128xf32> -> vector<8x128xf32>
    %cst_4 = arith.constant 9.99999974E-6 : f32
    %6 = vector.broadcast %cst_4 : f32 to vector<8x128xf32>
    %7 = arith.addf %5, %6 : vector<8x128xf32>
    %8 = math.rsqrt %7 : vector<8x128xf32>
    %9 = arith.mulf %3, %8 : vector<8x128xf32>
    %c0_5 = arith.constant 0 : index
    %c0_6 = arith.constant 0 : index
    %10 = vector.load %arg3[%c0_5, %c0_6] : memref<1x128xf32, #tpu.memory_space<vmem>>, vector<1x128xf32>
    %11 = vector.broadcast %10 : vector<1x128xf32> to vector<8x128xf32>
    %12 = arith.mulf %9, %11 : vector<8x128xf32>
    %c0_7 = arith.constant 0 : index
    %c0_8 = arith.constant 0 : index
    %13 = vector.load %arg4[%c0_7, %c0_8] : memref<1x128xf32, #tpu.memory_space<vmem>>, vector<1x128xf32>
    %14 = vector.broadcast %13 : vector<1x128xf32> to vector<8x128xf32>
    %15 = arith.addf %12, %14 : vector<8x128xf32>
    %c0_9 = arith.constant 0 : index
    %c0_10 = arith.constant 0 : index
    %16 = vector.load %arg5[%c0_9, %c0_10] : memref<1x128xf32, #tpu.memory_space<vmem>>, vector<1x128xf32>
    %17 = vector.broadcast %16 : vector<1x128xf32> to vector<8x128xf32>
    %18 = arith.addf %15, %17 : vector<8x128xf32>
    %c0_11 = arith.constant 0 : index
    %c0_12 = arith.constant 0 : index
    %19 = vector.load %arg6[%c0_11, %c0_12] : memref<16x8xf32, #tpu.memory_space<vmem>>, vector<16x8xf32>
    %cst_13 = arith.constant dense<0.000000e+00> : vector<16x128xf32>
    %20 = tpu.matmul %19, %18, %cst_13 {dimension_numbers = #tpu.dot_dimension_numbers<[1], [0], [0], [1], [0, 0, 1, 1], [], []>} : vector<16x8xf32>, vector<8x128xf32>, vector<16x128xf32> -> vector<16x128xf32>
    %c0_14 = arith.constant 0 : index
    %c0_15 = arith.constant 0 : index
    %21 = vector.load %arg7[%c0_14, %c0_15] : memref<16x1xf32, #tpu.memory_space<vmem>>, vector<16x1xf32>
    %22 = vector.broadcast %21 : vector<16x1xf32> to vector<16x128xf32>
    %23 = arith.addf %20, %22 : vector<16x128xf32>
    %cst_16 = arith.constant 0.636619746 : f32
    %24 = math.sqrt %cst_16 : f32
    %cst_17 = arith.constant 5.000000e-01 : f32
    %25 = vector.broadcast %cst_17 : f32 to vector<16x128xf32>
    %26 = arith.mulf %25, %23 : vector<16x128xf32>
    %cst_18 = arith.constant 4.471500e-02 : f32
    %27 = vector.broadcast %cst_18 : f32 to vector<16x128xf32>
    %28 = arith.mulf %27, %23 : vector<16x128xf32>
    %29 = arith.mulf %28, %23 : vector<16x128xf32>
    %30 = arith.mulf %29, %23 : vector<16x128xf32>
    %31 = arith.addf %23, %30 : vector<16x128xf32>
    %32 = vector.broadcast %24 : f32 to vector<16x128xf32>
    %33 = arith.mulf %32, %31 : vector<16x128xf32>
    %34 = math.tanh %33 : vector<16x128xf32>
    %cst_19 = arith.constant 1.000000e+00 : f32
    %35 = vector.broadcast %cst_19 : f32 to vector<16x128xf32>
    %36 = arith.addf %35, %34 : vector<16x128xf32>
    %37 = arith.mulf %26, %36 : vector<16x128xf32>
    %c0_20 = arith.constant 0 : index
    %c0_21 = arith.constant 0 : index
    %38 = vector.load %arg8[%c0_20, %c0_21] : memref<8x16xf32, #tpu.memory_space<vmem>>, vector<8x16xf32>
    %cst_22 = arith.constant dense<0.000000e+00> : vector<8x128xf32>
    %39 = tpu.matmul %38, %37, %cst_22 {dimension_numbers = #tpu.dot_dimension_numbers<[1], [0], [0], [1], [0, 0, 1, 1], [], []>} : vector<8x16xf32>, vector<16x128xf32>, vector<8x128xf32> -> vector<8x128xf32>
    %c0_23 = arith.constant 0 : index
    %c0_24 = arith.constant 0 : index
    %40 = vector.load %arg9[%c0_23, %c0_24] : memref<8x1xf32, #tpu.memory_space<vmem>>, vector<8x1xf32>
    %41 = vector.broadcast %40 : vector<8x1xf32> to vector<8x128xf32>
    %42 = arith.addf %39, %41 : vector<8x128xf32>
    %43 = arith.addf %0, %42 : vector<8x128xf32>
    %c0_25 = arith.constant 0 : index
    %c0_26 = arith.constant 0 : index
    %44 = vector.load %arg10[%c0_25, %c0_26] : memref<8x128xf32, #tpu.memory_space<vmem>>, vector<8x128xf32>
    tpu.vector_store %arg10[%c0_25, %c0_26], %43 {strides = array<i32>} : memref<8x128xf32, #tpu.memory_space<vmem>>, vector<8x128xf32>,
    return
  }
  func.func @transform_0(%arg0: i32) -> (i32, i32) {
    %c0_i32 = arith.constant 0 : i32
    %c0_i32_0 = arith.constant 0 : i32
    return %c0_i32, %arg0 : i32, i32
  }
  func.func @transform_1(%arg0: i32) -> (i32, i32) {
    %c0_i32 = arith.constant 0 : i32
    %c0_i32_0 = arith.constant 0 : i32
    %c0_i32_1 = arith.constant 0 : i32
    return %c0_i32, %c0_i32_0 : i32, i32
  }
  func.func @transform_2(%arg0: i32) -> (i32, i32) {
    %c0_i32 = arith.constant 0 : i32
    %c0_i32_0 = arith.constant 0 : i32
    return %c0_i32, %arg0 : i32, i32
  }
  func.func @transform_3(%arg0: i32) -> (i32, i32) {
    %c0_i32 = arith.constant 0 : i32
    %c0_i32_0 = arith.constant 0 : i32
    return %c0_i32, %arg0 : i32, i32
  }
  func.func @transform_4(%arg0: i32) -> (i32, i32) {
    %c0_i32 = arith.constant 0 : i32
    %c0_i32_0 = arith.constant 0 : i32
    return %c0_i32, %arg0 : i32, i32
  }
  func.func @transform_5(%arg0: i32) -> (i32, i32) {
    %c0_i32 = arith.constant 0 : i32
    %c0_i32_0 = arith.constant 0 : i32
    %c0_i32_1 = arith.constant 0 : i32
    return %c0_i32, %c0_i32_0 : i32, i32
  }
  func.func @transform_6(%arg0: i32) -> (i32, i32) {
    %c0_i32 = arith.constant 0 : i32
    %c0_i32_0 = arith.constant 0 : i32
    %c0_i32_1 = arith.constant 0 : i32
    return %c0_i32, %c0_i32_0 : i32, i32
  }
  func.func @transform_7(%arg0: i32) -> (i32, i32) {
    %c0_i32 = arith.constant 0 : i32
    %c0_i32_0 = arith.constant 0 : i32
    %c0_i32_1 = arith.constant 0 : i32
    return %c0_i32, %c0_i32_0 : i32, i32
  }
  func.func @transform_8(%arg0: i32) -> (i32, i32) {
    %c0_i32 = arith.constant 0 : i32
    %c0_i32_0 = arith.constant 0 : i32
    %c0_i32_1 = arith.constant 0 : i32
    return %c0_i32, %c0_i32_0 : i32, i32
  }
  func.func @transform_9(%arg0: i32) -> (i32, i32) {
    %c0_i32 = arith.constant 0 : i32
    %c0_i32_0 = arith.constant 0 : i32
    return %c0_i32, %arg0 : i32, i32
  }
}

</mosaic_0001>

<llo_original>
// kernel: tpu_custom_call.1
$region0: #{tpu_custom_call.1}
  #allocation0 [shape = 'u32[]', space=smem, size = 0x4, offset = 0x4, fixed_abs, tag = 'smem constant byte address 0x4 - core index']
  #allocation1 [shape = 'u32[144,128]{1,0:T(1,128)}', space=vmem, size = 0x12000, scoped, tag = 'internal scratch']
  %s0 = inlined_call_operand.vmem [shape: f32[8,256], index: 0, kind: input, shape index: {}]
  %s1 = inlined_call_operand.hbm [shape: f32[128,128], index: 1, kind: input, shape index: {}]
  %s2 = inlined_call_operand.vmem [shape: f32[1,256], index: 2, kind: input, shape index: {}]
  %s3 = inlined_call_operand.vmem [shape: f32[1,256], index: 3, kind: input, shape index: {}]
  %s4 = inlined_call_operand.vmem [shape: f32[1,256], index: 4, kind: input, shape index: {}]
  %s5 = inlined_call_operand.vmem [shape: f32[16,8], index: 5, kind: input, shape index: {}]
  %s6 = inlined_call_operand.vmem [shape: f32[16,1], index: 6, kind: input, shape index: {}]
  %s7 = inlined_call_operand.vmem [shape: f32[8,16], index: 7, kind: input, shape index: {}]
  %s8 = inlined_call_operand.vmem [shape: f32[8,1], index: 8, kind: input, shape index: {}]
  %s9 = inlined_call_operand.hbm [shape: f32[8,256], index: 9, kind: output, shape index: {}]
  %s10 = sld [smem:[#allocation0]]
  $region73: #{tpu_custom_call.1} parent=0
    _
  %s12 = ssub.s32 1, %s10
  %s13 = scalar_select 0, %s12, %s10
  $region1: #{tpu_custom_call.1} parent=0
    #allocation2 [shape = 'u8[65536]{0}', space=vmem, size = 0x10000, scoped, tag = 'input window, operand 1, single buffered']
    #allocation3 [shape = 's32[2]{0}', space=sflag, size = 0x8, scoped, tag = 'scoped memory for tpu_custom_call.1']
    #allocation4 [shape = 's32[2]{0}', space=sflag, size = 0x8, scoped, tag = 'scoped memory for tpu_custom_call.1']
    #allocation5 [shape = 'u8[8192]{0}', space=vmem, size = 0x2000, scoped, tag = 'output window, operand 0']
    %14 = vsyncpa [#allocation3], 0
    %15 = vsyncpa [#allocation4], 0
    %s16 = scalar_lea.sflag [#allocation4], 1
    %17 = vsyncpa %s16, 0
    loop: start=0, step=1, limit=4
    $region2: #{tpu_custom_call.1} parent=1 // loop_pre_header
      _
    $region3: #{tpu_custom_call.1} parent=1 // loop_header
      %s19 = sphi 0, %s23
      %p20 = scmp.ge.s32.totalorder %s19, 4
      %s29 = sphi 0, %s31
      %s32 = sphi 0, %s29
      %s33 = sphi 0, %s32
      %s49 = sphi 0, %s33
      %s53 = sphi 0, %s53
      %s55 = sphi 0, %s53
      %s56 = sphi 0, %s55
      %s70 = sphi 0, %s56
      %s76 = sphi 0, %s78
      %s79 = sphi 0, %s76
      %s80 = sphi 0, %s79
      %s96 = sphi 0, %s80
      %s102 = sphi 0, %s104
      %s105 = sphi 0, %s102
      %s106 = sphi 0, %s105
      %s122 = sphi 0, %s106
      %s128 = sphi 0, %s130
      %s131 = sphi 0, %s128
      %s132 = sphi 0, %s131
      %s148 = sphi 0, %s132
      %s152 = sphi 0, %s152
      %s154 = sphi 0, %s152
      %s155 = sphi 0, %s154
      %s169 = sphi 0, %s155
      %s173 = sphi 0, %s173
      %s175 = sphi 0, %s173
      %s176 = sphi 0, %s175
      %s190 = sphi 0, %s176
      %s194 = sphi 0, %s194
      %s196 = sphi 0, %s194
      %s197 = sphi 0, %s196
      %s211 = sphi 0, %s197
      %s215 = sphi 0, %s215
      %s217 = sphi 0, %s215
      %s218 = sphi 0, %s217
      %s232 = sphi 0, %s218
      %s238 = sphi 0, %s240
      %s241 = sphi 0, %s238
      %s242 = sphi 0, %s241
      %s258 = sphi 0, %s242
    $region4: #{tpu_custom_call.1} parent=1 // loop_header_branch
      %22 = sbr.rel (%p20) target = $region8
    $region5: #{tpu_custom_call.1} parent=1 // loop_body
      %s24 = ssub.s32 %s19, 1
      %s25 = ssub.s32 %s19, 2
      %s26 = sadd.s32 %s19, 1
      %s27 = ssub.s32 %s19, %s26
      %p28 = scmp.eq.s32.totalorder %s27, 0
      %s30 = sadd.s32 %s29, 1
      %s31 = scalar_select %p28, %s29, %s30
      %p34 = pneg %p28
      %p35 = scmp.eq.s32.totalorder %s19, 1
      %p36 = por %p34, %p35
      %p37 = scmp.ne.s32.totalorder %s29, %s32
      %p38 = scmp.eq.s32.totalorder %s19, 0
      %p39 = por %p37, %p38
      %p40 = scmp.ne.s32.totalorder %s29, %s32
      %p41 = scmp.eq.s32.totalorder %s24, 1
      %p42 = por %p40, %p41
      %p43 = scmp.ne.s32.totalorder %s32, %s33
      %p44 = scmp.eq.s32.totalorder %s24, 0
      %p45 = por %p43, %p44
      %p46 = scmp.ne.s32.totalorder %s32, %s33
      %p47 = scmp.eq.s32.totalorder %s25, 1
      %p48 = por %p46, %p47
      %p50 = scmp.ne.s32.totalorder %s33, %s49
      %p51 = scmp.eq.s32.totalorder %s25, 0
      %p52 = por %p50, %p51
      %s54 = sadd.s32 %s53, 1
      %p57 = scmp.eq.s32.totalorder %s19, 1
      %p58 = scmp.ne.s32.totalorder %s53, %s55
      %p59 = scmp.eq.s32.totalorder %s19, 0
      %p60 = por %p58, %p59
      %p61 = scmp.ne.s32.totalorder %s53, %s55
      %p62 = scmp.eq.s32.totalorder %s24, 1
      %p63 = por %p61, %p62
      %p64 = scmp.ne.s32.totalorder %s55, %s56
      %p65 = scmp.eq.s32.totalorder %s24, 0
      %p66 = por %p64, %p65
      %p67 = scmp.ne.s32.totalorder %s55, %s56
      %p68 = scmp.eq.s32.totalorder %s25, 1
      %p69 = por %p67, %p68
      %p71 = scmp.ne.s32.totalorder %s56, %s70
      %p72 = scmp.eq.s32.totalorder %s25, 0
      %p73 = por %p71, %p72
      %s74 = ssub.s32 %s19, %s26
      %p75 = scmp.eq.s32.totalorder %s74, 0
      %s77 = sadd.s32 %s76, 1
      %s78 = scalar_select %p75, %s76, %s77
      %p81 = pneg %p75
      %p82 = scmp.eq.s32.totalorder %s19, 1
      %p83 = por %p81, %p82
      %p84 = scmp.ne.s32.totalorder %s76, %s79
      %p85 = scmp.eq.s32.totalorder %s19, 0
      %p86 = por %p84, %p85
      %p87 = scmp.ne.s32.totalorder %s76, %s79
      %p88 = scmp.eq.s32.totalorder %s24, 1
      %p89 = por %p87, %p88
      %p90 = scmp.ne.s32.totalorder %s79, %s80
      %p91 = scmp.eq.s32.totalorder %s24, 0
      %p92 = por %p90, %p91
      %p93 = scmp.ne.s32.totalorder %s79, %s80
      %p94 = scmp.eq.s32.totalorder %s25, 1
      %p95 = por %p93, %p94
      %p97 = scmp.ne.s32.totalorder %s80, %s96
      %p98 = scmp.eq.s32.totalorder %s25, 0
      %p99 = por %p97, %p98
      %s100 = ssub.s32 %s19, %s26
      %p101 = scmp.eq.s32.totalorder %s100, 0
      %s103 = sadd.s32 %s102, 1
      %s104 = scalar_select %p101, %s102, %s103
      %p107 = pneg %p101
      %p108 = scmp.eq.s32.totalorder %s19, 1
      %p109 = por %p107, %p108
      %p110 = scmp.ne.s32.totalorder %s102, %s105
      %p111 = scmp.eq.s32.totalorder %s19, 0
      %p112 = por %p110, %p111
      %p113 = scmp.ne.s32.totalorder %s102, %s105
      %p114 = scmp.eq.s32.totalorder %s24, 1
      %p115 = por %p113, %p114
      %p116 = scmp.ne.s32.totalorder %s105, %s106
      %p117 = scmp.eq.s32.totalorder %s24, 0
      %p118 = por %p116, %p117
      %p119 = scmp.ne.s32.totalorder %s105, %s106
      %p120 = scmp.eq.s32.totalorder %s25, 1
      %p121 = por %p119, %p120
      %p123 = scmp.ne.s32.totalorder %s106, %s122
      %p124 = scmp.eq.s32.totalorder %s25, 0
      %p125 = por %p123, %p124
      %s126 = ssub.s32 %s19, %s26
      %p127 = scmp.eq.s32.totalorder %s126, 0
      %s129 = sadd.s32 %s128, 1
      %s130 = scalar_select %p127, %s128, %s129
      %p133 = pneg %p127
      %p134 = scmp.eq.s32.totalorder %s19, 1
      %p135 = por %p133, %p134
      %p136 = scmp.ne.s32.totalorder %s128, %s131
      %p137 = scmp.eq.s32.totalorder %s19, 0
      %p138 = por %p136, %p137
      %p139 = scmp.ne.s32.totalorder %s128, %s131
      %p140 = scmp.eq.s32.totalorder %s24, 1
      %p141 = por %p139, %p140
      %p142 = scmp.ne.s32.totalorder %s131, %s132
      %p143 = scmp.eq.s32.totalorder %s24, 0
      %p144 = por %p142, %p143
      %p145 = scmp.ne.s32.totalorder %s131, %s132
      %p146 = scmp.eq.s32.totalorder %s25, 1
      %p147 = por %p145, %p146
      %p149 = scmp.ne.s32.totalorder %s132, %s148
      %p150 = scmp.eq.s32.totalorder %s25, 0
      %p151 = por %p149, %p150
      %s153 = sadd.s32 %s152, 1
      %p156 = scmp.eq.s32.totalorder %s19, 1
      %p157 = scmp.ne.s32.totalorder %s152, %s154
      %p158 = scmp.eq.s32.totalorder %s19, 0
      %p159 = por %p157, %p158
      %p160 = scmp.ne.s32.totalorder %s152, %s154
      %p161 = scmp.eq.s32.totalorder %s24, 1
      %p162 = por %p160, %p161
      %p163 = scmp.ne.s32.totalorder %s154, %s155
      %p164 = scmp.eq.s32.totalorder %s24, 0
      %p165 = por %p163, %p164
      %p166 = scmp.ne.s32.totalorder %s154, %s155
      %p167 = scmp.eq.s32.totalorder %s25, 1
      %p168 = por %p166, %p167
      %p170 = scmp.ne.s32.totalorder %s155, %s169
      %p171 = scmp.eq.s32.totalorder %s25, 0
      %p172 = por %p170, %p171
      %s174 = sadd.s32 %s173, 1
      %p177 = scmp.eq.s32.totalorder %s19, 1
      %p178 = scmp.ne.s32.totalorder %s173, %s175
      %p179 = scmp.eq.s32.totalorder %s19, 0
      %p180 = por %p178, %p179
      %p181 = scmp.ne.s32.totalorder %s173, %s175
      %p182 = scmp.eq.s32.totalorder %s24, 1
      %p183 = por %p181, %p182
      %p184 = scmp.ne.s32.totalorder %s175, %s176
      %p185 = scmp.eq.s32.totalorder %s24, 0
      %p186 = por %p184, %p185
      %p187 = scmp.ne.s32.totalorder %s175, %s176
      %p188 = scmp.eq.s32.totalorder %s25, 1
      %p189 = por %p187, %p188
      %p191 = scmp.ne.s32.totalorder %s176, %s190
      %p192 = scmp.eq.s32.totalorder %s25, 0
      %p193 = por %p191, %p192
      %s195 = sadd.s32 %s194, 1
      %p198 = scmp.eq.s32.totalorder %s19, 1
      %p199 = scmp.ne.s32.totalorder %s194, %s196
      %p200 = scmp.eq.s32.totalorder %s19, 0
      %p201 = por %p199, %p200
      %p202 = scmp.ne.s32.totalorder %s194, %s196
      %p203 = scmp.eq.s32.totalorder %s24, 1
      %p204 = por %p202, %p203
      %p205 = scmp.ne.s32.totalorder %s196, %s197
      %p206 = scmp.eq.s32.totalorder %s24, 0
      %p207 = por %p205, %p206
      %p208 = scmp.ne.s32.totalorder %s196, %s197
      %p209 = scmp.eq.s32.totalorder %s25, 1
      %p210 = por %p208, %p209
      %p212 = scmp.ne.s32.totalorder %s197, %s211
      %p213 = scmp.eq.s32.totalorder %s25, 0
      %p214 = por %p212, %p213
      %s216 = sadd.s32 %s215, 1
      %p219 = scmp.eq.s32.totalorder %s19, 1
      %p220 = scmp.ne.s32.totalorder %s215, %s217
      %p221 = scmp.eq.s32.totalorder %s19, 0
      %p222 = por %p220, %p221
      %p223 = scmp.ne.s32.totalorder %s215, %s217
      %p224 = scmp.eq.s32.totalorder %s24, 1
      %p225 = por %p223, %p224
      %p226 = scmp.ne.s32.totalorder %s217, %s218
      %p227 = scmp.eq.s32.totalorder %s24, 0
      %p228 = por %p226, %p227
      %p229 = scmp.ne.s32.totalorder %s217, %s218
      %p230 = scmp.eq.s32.totalorder %s25, 1
      %p231 = por %p229, %p230
      %p233 = scmp.ne.s32.totalorder %s218, %s232
      %p234 = scmp.eq.s32.totalorder %s25, 0
      %p235 = por %p233, %p234
      %s236 = ssub.s32 %s19, %s26
      %p237 = scmp.eq.s32.totalorder %s236, 0
      %s239 = sadd.s32 %s238, 1
      %s240 = scalar_select %p237, %s238, %s239
      %p243 = pneg %p237
      %p244 = scmp.eq.s32.totalorder %s19, 1
      %p245 = por %p243, %p244
      %p246 = scmp.ne.s32.totalorder %s238, %s241
      %p247 = scmp.eq.s32.totalorder %s19, 0
      %p248 = por %p246, %p247
      %p249 = scmp.ne.s32.totalorder %s238, %s241
      %p250 = scmp.eq.s32.totalorder %s24, 1
      %p251 = por %p249, %p250
      %p252 = scmp.ne.s32.totalorder %s241, %s242
      %p253 = scmp.eq.s32.totalorder %s24, 0
      %p254 = por %p252, %p253
      %p255 = scmp.ne.s32.totalorder %s241, %s242
      %p256 = scmp.eq.s32.totalorder %s25, 1
      %p257 = por %p255, %p256
      %p259 = scmp.ne.s32.totalorder %s242, %s258
      %p260 = scmp.eq.s32.totalorder %s25, 0
      %p261 = por %p259, %p260
      %p262 = scmp.le.s32.totalorder 1, %s19
      %p263 = scmp.lt.s32.totalorder %s19, 3
      %p264 = pnand %p262, %p263
      %p265 = pneg %p264
      // Predicated region
      $region9: #{tpu_custom_call.1} parent=5 // pred_check
        _
      $region10: #{tpu_custom_call.1} parent=5 // pred_check_branch
        %267 = sbr.rel (%p264) target = $region12
      $region11: #{tpu_custom_call.1} parent=5 // pred_region
        %s268 = ssub.s32 %s19, 1
        // Predicated region
        $region13: #{tpu_custom_call.1} parent=11 // pred_check
          %p269 = pneg %p66
        $region14: #{tpu_custom_call.1} parent=11 // pred_check_branch
          %271 = sbr.rel (%p269) target = $region16
        $region15: #{tpu_custom_call.1} parent=11 // pred_region
          %s273 = ssub.s32 2048, 2048
          %274 = vsyncadd [#allocation3], %s273
          %s275 = sshll.u32 [#allocation2], 4
          %s276 = int_to_ptr.vmem [resolvable:$true] %s275
          %281 = dma.hbm_to_vmem [thread:$0]  %s1, 2048, %s276, [#allocation3], 128, 128, 8
        $region16: #{tpu_custom_call.1} parent=11 // pred_fallthru
          _
        // Predicated region
        $region17: #{tpu_custom_call.1} parent=11 // pred_check
          %p282 = pneg %p165
        $region18: #{tpu_custom_call.1} parent=11 // pred_check_branch
          %284 = sbr.rel (%p282) target = $region20
        $region19: #{tpu_custom_call.1} parent=11 // pred_region
          _
        $region20: #{tpu_custom_call.1} parent=11 // pred_fallthru
          _
        // Predicated region
        $region21: #{tpu_custom_call.1} parent=11 // pred_check
          %p285 = pneg %p186
        $region22: #{tpu_custom_call.1} parent=11 // pred_check_branch
          %287 = sbr.rel (%p285) target = $region24
        $region23: #{tpu_custom_call.1} parent=11 // pred_region
          _
        $region24: #{tpu_custom_call.1} parent=11 // pred_fallthru
          _
        // Predicated region
        $region25: #{tpu_custom_call.1} parent=11 // pred_check
          %p288 = pneg %p207
        $region26: #{tpu_custom_call.1} parent=11 // pred_check_branch
          %290 = sbr.rel (%p288) target = $region28
        $region27: #{tpu_custom_call.1} parent=11 // pred_region
          _
        $region28: #{tpu_custom_call.1} parent=11 // pred_fallthru
          _
        // Predicated region
        $region29: #{tpu_custom_call.1} parent=11 // pred_check
          %p291 = pneg %p228
        $region30: #{tpu_custom_call.1} parent=11 // pred_check_branch
          %293 = sbr.rel (%p291) target = $region32
        $region31: #{tpu_custom_call.1} parent=11 // pred_region
          _
        $region32: #{tpu_custom_call.1} parent=11 // pred_fallthru
          _
      $region12: #{tpu_custom_call.1} parent=5 // pred_fallthru
        _
      %p294 = scmp.lt.s32.totalorder %s19, 2
      // Predicated region
      $region33: #{tpu_custom_call.1} parent=5 // pred_check
        %p295 = pneg %p294
      $region34: #{tpu_custom_call.1} parent=5 // pred_check_branch
        %297 = sbr.rel (%p295) target = $region36
      $region35: #{tpu_custom_call.1} parent=5 // pred_region
        // Predicated region
        $region37: #{tpu_custom_call.1} parent=35 // pred_check
          %p298 = pneg %p39
        $region38: #{tpu_custom_call.1} parent=35 // pred_check_branch
          %300 = sbr.rel (%p298) target = $region40
        $region39: #{tpu_custom_call.1} parent=35 // pred_region
          %p301 = scmp.lt.s32.totalorder %s19, 1
          %s302 = scalar_select %p301, %s19, 1
          %s303 = smul.addr %s302, 8
          %s304 = scalar_lea.vmem %s0, %s303
        $region40: #{tpu_custom_call.1} parent=35 // pred_fallthru
          _
        // Predicated region
        $region41: #{tpu_custom_call.1} parent=35 // pred_check
          %p305 = pneg %p86
        $region42: #{tpu_custom_call.1} parent=35 // pred_check_branch
          %307 = sbr.rel (%p305) target = $region44
        $region43: #{tpu_custom_call.1} parent=35 // pred_region
          %p308 = scmp.lt.s32.totalorder %s19, 1
          %s309 = scalar_select %p308, %s19, 1
          %s310 = scalar_lea.vmem %s2, %s309
        $region44: #{tpu_custom_call.1} parent=35 // pred_fallthru
          _
        // Predicated region
        $region45: #{tpu_custom_call.1} parent=35 // pred_check
          %p311 = pneg %p112
        $region46: #{tpu_custom_call.1} parent=35 // pred_check_branch
          %313 = sbr.rel (%p311) target = $region48
        $region47: #{tpu_custom_call.1} parent=35 // pred_region
          %p314 = scmp.lt.s32.totalorder %s19, 1
          %s315 = scalar_select %p314, %s19, 1
          %s316 = scalar_lea.vmem %s3, %s315
        $region48: #{tpu_custom_call.1} parent=35 // pred_fallthru
          _
        // Predicated region
        $region49: #{tpu_custom_call.1} parent=35 // pred_check
          %p317 = pneg %p138
        $region50: #{tpu_custom_call.1} parent=35 // pred_check_branch
          %319 = sbr.rel (%p317) target = $region52
        $region51: #{tpu_custom_call.1} parent=35 // pred_region
          %p320 = scmp.lt.s32.totalorder %s19, 1
          %s321 = scalar_select %p320, %s19, 1
          %s322 = scalar_lea.vmem %s4, %s321
        $region52: #{tpu_custom_call.1} parent=35 // pred_fallthru
          _
      $region36: #{tpu_custom_call.1} parent=5 // pred_fallthru
        _
      %p323 = scmp.le.s32.totalorder 1, %s19
      %p324 = scmp.lt.s32.totalorder %s19, 3
      %p325 = pnand %p323, %p324
      %p326 = pneg %p325
      // Predicated region
      $region53: #{tpu_custom_call.1} parent=5 // pred_check
        _
      $region54: #{tpu_custom_call.1} parent=5 // pred_check_branch
        %328 = sbr.rel (%p325) target = $region56
      $region55: #{tpu_custom_call.1} parent=5 // pred_region
        %s329 = ssub.s32 %s19, 1
        // Predicated region
        $region57: #{tpu_custom_call.1} parent=55 // pred_check
          %p330 = pneg %p66
        $region58: #{tpu_custom_call.1} parent=55 // pred_check_branch
          %332 = sbr.rel (%p330) target = $region60
        $region59: #{tpu_custom_call.1} parent=55 // pred_region
          %333 = dma.done [#allocation3], 2048
        $region60: #{tpu_custom_call.1} parent=55 // pred_fallthru
          _
        %p334 = scmp.lt.s32.totalorder %s24, 1
        %s335 = scalar_select %p334, %s24, 1
        %s336 = smul.addr %s335, 8
        %s337 = scalar_lea.vmem %s0, %s336
        %p338 = pneg %p45
        %p339 = pneg %p42
        %p340 = pneg %p66
        %p341 = pneg %p63
        %p342 = scmp.lt.s32.totalorder %s24, 1
        %s343 = scalar_select %p342, %s24, 1
        %s344 = scalar_lea.vmem %s2, %s343
        %p345 = pneg %p92
        %p346 = pneg %p89
        %p347 = scmp.lt.s32.totalorder %s24, 1
        %s348 = scalar_select %p347, %s24, 1
        %s349 = scalar_lea.vmem %s3, %s348
        %p350 = pneg %p118
        %p351 = pneg %p115
        %p352 = scmp.lt.s32.totalorder %s24, 1
        %s353 = scalar_select %p352, %s24, 1
        %s354 = scalar_lea.vmem %s4, %s353
        %p355 = pneg %p144
        %p356 = pneg %p141
        %p357 = pneg %p165
        %p358 = pneg %p162
        %p359 = pneg %p186
        %p360 = pneg %p183
        %p361 = pneg %p207
        %p362 = pneg %p204
        %p363 = pneg %p228
        %p364 = pneg %p225
        %p365 = pneg %p254
        %p366 = pneg %p251
        %s367 = sand.u32 %s241, 1
        %s368 = scalar_lea.sflag [#allocation4], %s367
        %s369 = sand.u32 %s241, 1
        %s370 = smul.addr %s369, 8
        %s371 = scalar_lea.vmem [#allocation5], %s370
        %p372 = scmp.lt.s32.totalorder %s24, 1
        %s373 = scalar_select %p372, %s24, 1
        %s374 = smul.addr %s373, 8
        %s375 = scalar_lea.vmem %s0, %s374
        %p376 = scmp.lt.s32.totalorder %s24, 1
        %s377 = scalar_select %p376, %s24, 1
        %s378 = scalar_lea.vmem %s2, %s377
        %p379 = scmp.lt.s32.totalorder %s24, 1
        %s380 = scalar_select %p379, %s24, 1
        %s381 = scalar_lea.vmem %s3, %s380
        %p382 = scmp.lt.s32.totalorder %s24, 1
        %s383 = scalar_select %p382, %s24, 1
        %s384 = scalar_lea.vmem %s4, %s383
        %v385 = vld [vmem:[%s375] sm:$0xff]
        %v386 = vld [vmem:[#allocation2] sm:$0xff]
        %v387 = vld [vmem:[#allocation2 + $0x8] sm:$0xff]
        %v388 = vld [vmem:[#allocation2 + $0x10] sm:$0xff]
        %v389 = vld [vmem:[#allocation2 + $0x18] sm:$0xff]
        %v390 = vld [vmem:[#allocation2 + $0x20] sm:$0xff]
        %v391 = vld [vmem:[#allocation2 + $0x28] sm:$0xff]
        %v392 = vld [vmem:[#allocation2 + $0x30] sm:$0xff]
        %v393 = vld [vmem:[#allocation2 + $0x38] sm:$0xff]
        %v394 = vld [vmem:[#allocation2 + $0x40] sm:$0xff]
        %v395 = vld [vmem:[#allocation2 + $0x48] sm:$0xff]
        %v396 = vld [vmem:[#allocation2 + $0x50] sm:$0xff]
        %v397 = vld [vmem:[#allocation2 + $0x58] sm:$0xff]
        %v398 = vld [vmem:[#allocation2 + $0x60] sm:$0xff]
        %v399 = vld [vmem:[#allocation2 + $0x68] sm:$0xff]
        %v400 = vld [vmem:[#allocation2 + $0x70] sm:$0xff]
        %v401 = vld [vmem:[#allocation2 + $0x78] sm:$0xff]
        %402 = vmatprep.subr.mxu0 0.0
        %403 = vmatpush1.msra.mxu0 %v386
        %404 = vmatprep.subr.mxu0 0.0
        %405 = vmatpush1.msra.mxu0 %v387
        %406 = vmatprep.subr.mxu0 0.0
        %407 = vmatpush1.msra.mxu0 %v388
        %408 = vmatprep.subr.mxu0 0.0
        %409 = vmatpush1.msra.mxu0 %v389
        %410 = vmatprep.subr.mxu0 0.0
        %411 = vmatpush1.msra.mxu0 %v390
        %412 = vmatprep.subr.mxu0 0.0
        %413 = vmatpush1.msra.mxu0 %v391
        %414 = vmatprep.subr.mxu0 0.0
        %415 = vmatpush1.msra.mxu0 %v392
        %416 = vmatprep.subr.mxu0 0.0
        %417 = vmatpush1.msra.mxu0 %v393
        %418 = vmatprep.subr.mxu0 0.0
        %419 = vmatpush1.msra.mxu0 %v394
        %420 = vmatprep.subr.mxu0 0.0
        %421 = vmatpush1.msra.mxu0 %v395
        %422 = vmatprep.subr.mxu0 0.0
        %423 = vmatpush1.msra.mxu0 %v396
        %424 = vmatprep.subr.mxu0 0.0
        %425 = vmatpush1.msra.mxu0 %v397
        %426 = vmatprep.subr.mxu0 0.0
        %427 = vmatpush1.msra.mxu0 %v398
        %428 = vmatprep.subr.mxu0 0.0
        %429 = vmatpush1.msra.mxu0 %v399
        %430 = vmatprep.subr.mxu0 0.0
        %431 = vmatpush1.msra.mxu0 %v400
        %432 = vmatprep.subr.mxu0 0.0
        %433 = vmatpush1.msra.mxu0 %v401
        %434 = vmatprep.subr.mxu0 0.0
        %435 = vmatpush1.msra.mxu0 0.0
        %436 = vmatprep.subr.mxu0 0.0
        %437 = vmatpush1.msra.mxu0 0.0
        %438 = vmatprep.subr.mxu0 0.0
        %439 = vmatpush1.msra.mxu0 0.0
        %440 = vmatprep.subr.mxu0 0.0
        %441 = vmatpush1.msra.mxu0 0.0
        %442 = vmatprep.subr.mxu0 0.0
        %443 = vmatpush1.msra.mxu0 0.0
        %444 = vmatprep.subr.mxu0 0.0
        %445 = vmatpush1.msra.mxu0 0.0
        %446 = vmatprep.subr.mxu0 0.0
        %447 = vmatpush1.msra.mxu0 0.0
        %448 = vmatprep.subr.mxu0 0.0
        %449 = vmatpush1.msra.mxu0 0.0
        %450 = vmatprep.subr.mxu0 0.0
        %451 = vmatpush1.msra.mxu0 0.0
        %452 = vmatprep.subr.mxu0 0.0
        %453 = vmatpush1.msra.mxu0 0.0
        %454 = vmatprep.subr.mxu0 0.0
        %455 = vmatpush1.msra.mxu0 0.0
        %456 = vmatprep.subr.mxu0 0.0
        %457 = vmatpush1.msra.mxu0 0.0
        %458 = vmatprep.subr.mxu0 0.0
        %459 = vmatpush1.msra.mxu0 0.0
        %460 = vmatprep.subr.mxu0 0.0
        %461 = vmatpush1.msra.mxu0 0.0
        %462 = vmatprep.subr.mxu0 0.0
        %463 = vmatpush1.msra.mxu0 0.0
        %464 = vmatprep.subr.mxu0 0.0
        %465 = vmatpush1.msra.mxu0 0.0
        %466 = vmatprep.mubr.f32.mxu0 0.0
        %467 = vmatmul.mubr.f32.gmra.mrb[0].mxu0 %v385
        %v468 = vpop.f32.mrb[0].mxu0
        %v469 = vadd.f32 0.0, %v468
        %v470 = vpop.f32.mrb[0].mxu0
        %471 = vdwg.mxu0
        %v472 = vsub.f32 %v385, %v469
        %v473 = vmul.f32 %v472, %v472
        %474 = vmatprep.subr.mxu0 0.0
        %475 = vmatpush1.msra.mxu0 %v386
        %476 = vmatprep.subr.mxu0 0.0
        %477 = vmatpush1.msra.mxu0 %v387
        %478 = vmatprep.subr.mxu0 0.0
        %479 = vmatpush1.msra.mxu0 %v388
        %480 = vmatprep.subr.mxu0 0.0
        %481 = vmatpush1.msra.mxu0 %v389
        %482 = vmatprep.subr.mxu0 0.0
        %483 = vmatpush1.msra.mxu0 %v390
        %484 = vmatprep.subr.mxu0 0.0
        %485 = vmatpush1.msra.mxu0 %v391
        %486 = vmatprep.subr.mxu0 0.0
        %487 = vmatpush1.msra.mxu0 %v392
        %488 = vmatprep.subr.mxu0 0.0
        %489 = vmatpush1.msra.mxu0 %v393
        %490 = vmatprep.subr.mxu0 0.0
        %491 = vmatpush1.msra.mxu0 %v394
        %492 = vmatprep.subr.mxu0 0.0
        %493 = vmatpush1.msra.mxu0 %v395
        %494 = vmatprep.subr.mxu0 0.0
        %495 = vmatpush1.msra.mxu0 %v396
        %496 = vmatprep.subr.mxu0 0.0
        %497 = vmatpush1.msra.mxu0 %v397
        %498 = vmatprep.subr.mxu0 0.0
        %499 = vmatpush1.msra.mxu0 %v398
        %500 = vmatprep.subr.mxu0 0.0
        %501 = vmatpush1.msra.mxu0 %v399
        %502 = vmatprep.subr.mxu0 0.0
        %503 = vmatpush1.msra.mxu0 %v400
        %504 = vmatprep.subr.mxu0 0.0
        %505 = vmatpush1.msra.mxu0 %v401
        %506 = vmatprep.subr.mxu0 0.0
        %507 = vmatpush1.msra.mxu0 0.0
        %508 = vmatprep.subr.mxu0 0.0
        %509 = vmatpush1.msra.mxu0 0.0
        %510 = vmatprep.subr.mxu0 0.0
        %511 = vmatpush1.msra.mxu0 0.0
        %512 = vmatprep.subr.mxu0 0.0
        %513 = vmatpush1.msra.mxu0 0.0
        %514 = vmatprep.subr.mxu0 0.0
        %515 = vmatpush1.msra.mxu0 0.0
        %516 = vmatprep.subr.mxu0 0.0
        %517 = vmatpush1.msra.mxu0 0.0
        %518 = vmatprep.subr.mxu0 0.0
        %519 = vmatpush1.msra.mxu0 0.0
        %520 = vmatprep.subr.mxu0 0.0
        %521 = vmatpush1.msra.mxu0 0.0
        %522 = vmatprep.subr.mxu0 0.0
        %523 = vmatpush1.msra.mxu0 0.0
        %524 = vmatprep.subr.mxu0 0.0
        %525 = vmatpush1.msra.mxu0 0.0
        %526 = vmatprep.subr.mxu0 0.0
        %527 = vmatpush1.msra.mxu0 0.0
        %528 = vmatprep.subr.mxu0 0.0
        %529 = vmatpush1.msra.mxu0 0.0
        %530 = vmatprep.subr.mxu0 0.0
        %531 = vmatpush1.msra.mxu0 0.0
        %532 = vmatprep.subr.mxu0 0.0
        %533 = vmatpush1.msra.mxu0 0.0
        %534 = vmatprep.subr.mxu0 0.0
        %535 = vmatpush1.msra.mxu0 0.0
        %536 = vmatprep.subr.mxu0 0.0
        %537 = vmatpush1.msra.mxu0 0.0
        %538 = vmatprep.mubr.f32.mxu0 0.0
        %539 = vmatmul.mubr.f32.gmra.mrb[0].mxu0 %v473
        %v540 = vpop.f32.mrb[0].mxu0
        %v541 = vadd.f32 1e-05, %v540
        %v542 = vpop.f32.mrb[0].mxu0
        %543 = vdwg.mxu0
        %v544 = vrsqrt.pop %v541
        %v545 = vmul.f32 %v472, %v544
        %v546 = vld [vmem:[%s378] sm:$0x1]
        %v548 = vlaneseq
        %v549 = vshrl.u32 %v548, 7
        %v550 = vsub.s32 0, %v549
        %v551 = vrot.slane %v546, %v550
        %v553 = vmul.f32 %v545, %v551
        %v554 = vld [vmem:[%s381] sm:$0x1]
        %v556 = vlaneseq
        %v557 = vshrl.u32 %v556, 7
        %v558 = vsub.s32 0, %v557
        %v559 = vrot.slane %v554, %v558
        %v561 = vadd.f32 %v553, %v559
        %v562 = vld [vmem:[%s384] sm:$0x1]
        %v564 = vlaneseq
        %v565 = vshrl.u32 %v564, 7
        %v566 = vsub.s32 0, %v565
        %v567 = vrot.slane %v562, %v566
        %v569 = vadd.f32 %v561, %v567
        %v570 = vld [vmem:[%s5] sm:$0xff]
        %v571 = vld [vmem:[%s5 + $0x8] sm:$0xff]
        %v572 = vld [vmem:[%s6] sm:$0xff]
        %v573 = vld [vmem:[%s6 + $0x8] sm:$0xff]
        %575 = vset.pattern.permute.xlu0 0
        %576 = vperm.xlu0 %575, %v572
        %v577 = vpop.permute.xlu0 %576
        %580 = vset.pattern.permute.xlu0 0
        %581 = vperm.xlu0 %580, %v573
        %v582 = vpop.permute.xlu0 %581
        %vm584 = vcmask 64512
        %v586 = vsel %vm584, %v570, 0
        %v589 = vsel %vm584, %v571, 0
        %591 = vmatprep.subr.mxu0 0.0
        %592 = vmatpush1.msra.mxu0 %v569
        %593 = vmatprep.subr.mxu0 0.0
        %594 = vmatpush1.msra.mxu0 0.0
        %595 = vmatprep.subr.mxu0 0.0
        %596 = vmatpush1.msra.mxu0 0.0
        %597 = vmatprep.subr.mxu0 0.0
        %598 = vmatpush1.msra.mxu0 0.0
        %599 = vmatprep.subr.mxu0 0.0
        %600 = vmatpush1.msra.mxu0 0.0
        %601 = vmatprep.subr.mxu0 0.0
        %602 = vmatpush1.msra.mxu0 0.0
        %603 = vmatprep.subr.mxu0 0.0
        %604 = vmatpush1.msra.mxu0 0.0
        %605 = vmatprep.subr.mxu0 0.0
        %606 = vmatpush1.msra.mxu0 0.0
        %607 = vmatprep.subr.mxu0 0.0
        %608 = vmatpush1.msra.mxu0 0.0
        %609 = vmatprep.subr.mxu0 0.0
        %610 = vmatpush1.msra.mxu0 0.0
        %611 = vmatprep.subr.mxu0 0.0
        %612 = vmatpush1.msra.mxu0 0.0
        %613 = vmatprep.subr.mxu0 0.0
        %614 = vmatpush1.msra.mxu0 0.0
        %615 = vmatprep.subr.mxu0 0.0
        %616 = vmatpush1.msra.mxu0 0.0
        %617 = vmatprep.subr.mxu0 0.0
        %618 = vmatpush1.msra.mxu0 0.0
        %619 = vmatprep.subr.mxu0 0.0
        %620 = vmatpush1.msra.mxu0 0.0
        %621 = vmatprep.subr.mxu0 0.0
        %622 = vmatpush1.msra.mxu0 0.0
        %623 = vmatprep.subr.mxu0 0.0
        %624 = vmatpush1.msra.mxu0 0.0
        %625 = vmatprep.subr.mxu0 0.0
        %626 = vmatpush1.msra.mxu0 0.0
        %627 = vmatprep.subr.mxu0 0.0
        %628 = vmatpush1.msra.mxu0 0.0
        %629 = vmatprep.subr.mxu0 0.0
        %630 = vmatpush1.msra.mxu0 0.0
        %631 = vmatprep.subr.mxu0 0.0
        %632 = vmatpush1.msra.mxu0 0.0
        %633 = vmatprep.subr.mxu0 0.0
        %634 = vmatpush1.msra.mxu0 0.0
        %635 = vmatprep.subr.mxu0 0.0
        %636 = vmatpush1.msra.mxu0 0.0
        %637 = vmatprep.subr.mxu0 0.0
        %638 = vmatpush1.msra.mxu0 0.0
        %639 = vmatprep.subr.mxu0 0.0
        %640 = vmatpush1.msra.mxu0 0.0
        %641 = vmatprep.subr.mxu0 0.0
        %642 = vmatpush1.msra.mxu0 0.0
        %643 = vmatprep.subr.mxu0 0.0
        %644 = vmatpush1.msra.mxu0 0.0
        %645 = vmatprep.subr.mxu0 0.0
        %646 = vmatpush1.msra.mxu0 0.0
        %647 = vmatprep.subr.mxu0 0.0
        %648 = vmatpush1.msra.mxu0 0.0
        %649 = vmatprep.subr.mxu0 0.0
        %650 = vmatpush1.msra.mxu0 0.0
        %651 = vmatprep.subr.mxu0 0.0
        %652 = vmatpush1.msra.mxu0 0.0
        %653 = vmatprep.subr.mxu0 0.0
        %654 = vmatpush1.msra.mxu0 0.0
        %655 = vmatprep.mubr.f32.mxu0 0.0
        %656 = vmatmul.mubr.f32.gmra.mrb[0].mxu0 %v586
        %v657 = vpop.f32.mrb[0].mxu0
        %v658 = vadd.f32 %v577, %v657
        %v659 = vpop.f32.mrb[0].mxu0
        %660 = vmatprep.mubr.f32.mxu0 0.0
        %661 = vmatmul.mubr.f32.gmra.mrb[0].mxu0 %v589
        %v662 = vpop.f32.mrb[0].mxu0
        %v663 = vadd.f32 %v582, %v662
        %v664 = vpop.f32.mrb[0].mxu0
        %665 = vdwg.mxu0
        %v666 = vmul.f32 %v658, 0.5
        %v667 = vmul.f32 %v663, 0.5
        %v668 = vmul.f32 %v658, 0.044715
        %v669 = vmul.f32 %v663, 0.044715
        %v670 = vmul.f32 %v668, %v658
        %v671 = vmul.f32 %v669, %v663
        %v672 = vmul.f32 %v670, %v658
        %v673 = vmul.f32 %v671, %v663
        %v674 = vadd.f32 %v658, %v672
        %v675 = vadd.f32 %v663, %v673
        %v676 = vmul.f32 %v674, 0.7978845
        %v677 = vmul.f32 %v675, 0.7978845
        %v678 = vtanh.pop %v676
        %v679 = vtanh.pop %v677
        %v680 = vadd.f32 %v678, 1.0
        %v681 = vadd.f32 %v679, 1.0
        %v682 = vmul.f32 %v666, %v680
        %v683 = vmul.f32 %v667, %v681
        %v684 = vld [vmem:[%s7] sm:$0xff]
        %v685 = vld [vmem:[%s8] sm:$0xff]
        %687 = vset.pattern.permute.xlu0 0
        %688 = vperm.xlu0 %687, %v685
        %v689 = vpop.permute.xlu0 %688
        %vm691 = vcmask 130048
        %v693 = vsel %vm691, %v684, 0
        %695 = vmatprep.subr.mxu0 0.0
        %696 = vmatpush1.msra.mxu0 %v682
        %697 = vmatprep.subr.mxu0 0.0
        %698 = vmatpush1.msra.mxu0 %v683
        %699 = vmatprep.subr.mxu0 0.0
        %700 = vmatpush1.msra.mxu0 0.0
        %701 = vmatprep.subr.mxu0 0.0
        %702 = vmatpush1.msra.mxu0 0.0
        %703 = vmatprep.subr.mxu0 0.0
        %704 = vmatpush1.msra.mxu0 0.0
        %705 = vmatprep.subr.mxu0 0.0
        %706 = vmatpush1.msra.mxu0 0.0
        %707 = vmatprep.subr.mxu0 0.0
        %708 = vmatpush1.msra.mxu0 0.0
        %709 = vmatprep.subr.mxu0 0.0
        %710 = vmatpush1.msra.mxu0 0.0
        %711 = vmatprep.subr.mxu0 0.0
        %712 = vmatpush1.msra.mxu0 0.0
        %713 = vmatprep.subr.mxu0 0.0
        %714 = vmatpush1.msra.mxu0 0.0
        %715 = vmatprep.subr.mxu0 0.0
        %716 = vmatpush1.msra.mxu0 0.0
        %717 = vmatprep.subr.mxu0 0.0
        %718 = vmatpush1.msra.mxu0 0.0
        %719 = vmatprep.subr.mxu0 0.0
        %720 = vmatpush1.msra.mxu0 0.0
        %721 = vmatprep.subr.mxu0 0.0
        %722 = vmatpush1.msra.mxu0 0.0
        %723 = vmatprep.subr.mxu0 0.0
        %724 = vmatpush1.msra.mxu0 0.0
        %725 = vmatprep.subr.mxu0 0.0
        %726 = vmatpush1.msra.mxu0 0.0
        %727 = vmatprep.subr.mxu0 0.0
        %728 = vmatpush1.msra.mxu0 0.0
        %729 = vmatprep.subr.mxu0 0.0
        %730 = vmatpush1.msra.mxu0 0.0
        %731 = vmatprep.subr.mxu0 0.0
        %732 = vmatpush1.msra.mxu0 0.0
        %733 = vmatprep.subr.mxu0 0.0
        %734 = vmatpush1.msra.mxu0 0.0
        %735 = vmatprep.subr.mxu0 0.0
        %736 = vmatpush1.msra.mxu0 0.0
        %737 = vmatprep.subr.mxu0 0.0
        %738 = vmatpush1.msra.mxu0 0.0
        %739 = vmatprep.subr.mxu0 0.0
        %740 = vmatpush1.msra.mxu0 0.0
        %741 = vmatprep.subr.mxu0 0.0
        %742 = vmatpush1.msra.mxu0 0.0
        %743 = vmatprep.subr.mxu0 0.0
        %744 = vmatpush1.msra.mxu0 0.0
        %745 = vmatprep.subr.mxu0 0.0
        %746 = vmatpush1.msra.mxu0 0.0
        %747 = vmatprep.subr.mxu0 0.0
        %748 = vmatpush1.msra.mxu0 0.0
        %749 = vmatprep.subr.mxu0 0.0
        %750 = vmatpush1.msra.mxu0 0.0
        %751 = vmatprep.subr.mxu0 0.0
        %752 = vmatpush1.msra.mxu0 0.0
        %753 = vmatprep.subr.mxu0 0.0
        %754 = vmatpush1.msra.mxu0 0.0
        %755 = vmatprep.subr.mxu0 0.0
        %756 = vmatpush1.msra.mxu0 0.0
        %757 = vmatprep.subr.mxu0 0.0
        %758 = vmatpush1.msra.mxu0 0.0
        %759 = vmatprep.mubr.f32.mxu0 0.0
        %760 = vmatmul.mubr.f32.gmra.mrb[0].mxu0 %v693
        %v761 = vpop.f32.mrb[0].mxu0
        %v762 = vadd.f32 %v689, %v761
        %v763 = vpop.f32.mrb[0].mxu0
        %764 = vdwg.mxu0
        %v765 = vadd.f32 %v385, %v762
        %766 = vst [vmem:[%s371] sm:$0xff] %v765
        %s767 = sand.u32 %s241, 1
        %s768 = scalar_lea.sflag [#allocation4], %s767
        %s769 = sand.u32 %s241, 1
        %s770 = smul.addr %s769, 8
        %s771 = scalar_lea.vmem [#allocation5], %s770
        // Predicated region
        $region61: #{tpu_custom_call.1} parent=55 // pred_check
          %p772 = pneg %p251
        $region62: #{tpu_custom_call.1} parent=55 // pred_check_branch
          %774 = sbr.rel (%p772) target = $region64
        $region63: #{tpu_custom_call.1} parent=55 // pred_region
          %s776 = ssub.s32 128, 128
          %777 = vsyncadd %s768, %s776
          %s778 = smul.addr %s24, 128
          %s779 = scalar_lea.hbm %s9, %s778
          %s781 = sshll.u32 %s771, 4
          %s782 = int_to_ptr.vmem [resolvable:$true] %s781
          %784 = dma.vmem_to_hbm [thread:$0]  %s782, 128, %s779, %s768
        $region64: #{tpu_custom_call.1} parent=55 // pred_fallthru
          _
      $region56: #{tpu_custom_call.1} parent=5 // pred_fallthru
        _
      %p785 = scmp.le.s32.totalorder 2, %s19
      // Predicated region
      $region65: #{tpu_custom_call.1} parent=5 // pred_check
        %p786 = pneg %p785
      $region66: #{tpu_custom_call.1} parent=5 // pred_check_branch
        %788 = sbr.rel (%p786) target = $region68
      $region67: #{tpu_custom_call.1} parent=5 // pred_region
        %s789 = ssub.s32 %s19, 2
        // Predicated region
        $region69: #{tpu_custom_call.1} parent=67 // pred_check
          %p790 = pneg %p257
        $region70: #{tpu_custom_call.1} parent=67 // pred_check_branch
          %792 = sbr.rel (%p790) target = $region72
        $region71: #{tpu_custom_call.1} parent=67 // pred_region
          %s793 = sand.u32 %s242, 1
          %s794 = scalar_lea.sflag [#allocation4], %s793
          %s795 = sand.u32 %s242, 1
          %s796 = smul.addr %s795, 8
          %s797 = scalar_lea.vmem [#allocation5], %s796
          %798 = dma.done %s794, 128
        $region72: #{tpu_custom_call.1} parent=67 // pred_fallthru
          _
      $region68: #{tpu_custom_call.1} parent=5 // pred_fallthru
        _
    $region6: #{tpu_custom_call.1} parent=1 // loop_footer
      %s23 = sadd.s32 1, %s19
    $region7: #{tpu_custom_call.1} parent=1 // loop_footer_branch
      %18 = sbr.rel target = $region3
    $region8: #{tpu_custom_call.1} parent=1 // loop_exit
      _
    %799 = vsyncpa [#allocation3], 1
    %s800 = scalar_lea.sflag [#allocation3], 1
    %801 = vsyncpa %s800, 1
    %802 = vsyncpa [#allocation4], 1
    %s803 = scalar_lea.sflag [#allocation4], 1
    %804 = vsyncpa %s803, 1

</llo_original>
